<compile_context>
chip_gen: v5e
topology: v5e:2x2
jax: 0.10.0
libtpu: 0.0.40
codegen_flags: <defaults>
</compile_context>

<pallas_src>
import numpy as np

import jax
import jax.numpy as jnp
from jax.experimental import pallas as pl
from jax.experimental.pallas import tpu as pltpu

# ----------------------------------------------------------------------------
# Fixed hyper-parameters (consistent with the PyTorch __init__)
# ----------------------------------------------------------------------------
INPUT_CHANNELS = 4
SEQ_LEN = 16
CONV_FILTERS = (8, 16)
CONV_KERNEL_SIZE = 3
POOL_SIZE = 2
LSTM_UNITS = 32            # 4*H = 128 -> packed gates exactly fill the lane dim
DENSE_UNITS = 16
BATCH = 2

# Derived static geometry
_PAD = CONV_KERNEL_SIZE // 2
_L1 = SEQ_LEN                      # conv1 'same' output length (16)
_LP1 = _L1 // POOL_SIZE            # 8
_L2 = _LP1                         # conv2 'same' output length (8)
_T = _L2 // POOL_SIZE              # 4  LSTM timesteps
_FEAT = CONV_FILTERS[1]            # 16 LSTM input features

# Weight-slab row offsets: every sub-block starts on an 8-row boundary.
ROW_C1 = 0        # conv1 [taps|bias]           (13, 8)
ROW_C2 = 16       # conv2 [taps|bias]           (25, 16)
ROW_WIH_F = 48    # Wih forward  (g cols x2)    (16, 128)
ROW_WIH_B = 64    # Wih backward (g cols x2)    (16, 128)
ROW_WHH_F = 80    # Whh forward  (g cols x2)    (32, 128)
ROW_B_F = 112     # bias forward (g cols x2)    (1, 128)
ROW_B_B = 120     # bias backward (g cols x2)   (1, 128)
ROW_W1 = 128      # dense1 weight               (64, 16)
ROW_HEAD = 192    # row 0: dense1 bias, row 1: dense2 weight^T, row 2: dense2 bias
ROW_SEL1 = 200    # stacked pool selector, stage 1   (32, 32)
ROW_SEL2 = 232    # stacked pool selector, stage 2   (16, 16)
SLAB_ROWS = 248
SLAB_LANES = 128


# ----------------------------------------------------------------------------
# Fused kernel: conv stack + BiLSTM(last step) + dense head, whole batch
# ----------------------------------------------------------------------------
def fused_forward_kernel(x_ref, w_ref, o_ref):
    f32 = jnp.float32
    B, H, D, K, P = BATCH, LSTM_UNITS, DENSE_UNITS, CONV_KERNEL_SIZE, POOL_SIZE
    C0, (C1, C2) = INPUT_CHANNELS, CONV_FILTERS

    # ---- weight sub-blocks: Ref slices at 8-aligned row starts --------------
    c1w = w_ref[ROW_C1:ROW_C1 + K * C0 + 1, 0:C1]       # (13, 8)
    c2w = w_ref[ROW_C2:ROW_C2 + K * C1 + 1, 0:C2]       # (25, 16)
    wih_f = w_ref[ROW_WIH_F:ROW_WIH_F + _FEAT, :]       # (16, 128)
    wih_b = w_ref[ROW_WIH_B:ROW_WIH_B + _FEAT, :]       # (16, 128)
    whh_f = w_ref[ROW_WHH_F:ROW_WHH_F + H, :]           # (32, 128)
    bias_f = w_ref[ROW_B_F:ROW_B_F + 1, :]              # (1, 128)
    bias_b = w_ref[ROW_B_B:ROW_B_B + 1, :]              # (1, 128)
    w1 = w_ref[ROW_W1:ROW_W1 + 2 * H, 0:D]              # (64, 16)
    head = w_ref[ROW_HEAD:ROW_HEAD + 8, :]              # (8, 128) single vreg
    b1 = head[0:1, 0:D]                                 # (1, 16)
    w2t = head[1:2, 0:D]                                # (1, 16)
    b2 = head[2:3, 0:1]                                 # (1, 1)
    sel1 = w_ref[ROW_SEL1:ROW_SEL1 + P * B * _LP1, 0:B * _L1]   # (32, 32)
    sel2 = w_ref[ROW_SEL2:ROW_SEL2 + P * B * _T, 0:B * _L2]     # (16, 16)

    def conv_relu(x_stacked, c_in, l_in, w_slab):
        """'same' Conv1d + ReLU on batch-stacked rows via ONE im2col matmul.

        x_stacked: (B*l_in, c_in), batch-major rows.  Bias folded via the
        ones column against the slab's last row.
        """
        zrow = jnp.zeros((_PAD, c_in), f32)
        ones = jnp.ones((l_in, 1), f32)
        rows = []
        for b in range(B):                               # cheap concats only
            xb = x_stacked[b * l_in:(b + 1) * l_in, :]   # aligned 8k-row slice
            xp = jnp.concatenate([zrow, xb, zrow], axis=0)
            taps = [xp[j:j + l_in, :] for j in range(K)]
            rows.append(jnp.concatenate(taps + [ones], axis=1))
        im2col = jnp.concatenate(rows, axis=0)           # (B*l_in, K*c_in+1)
        y = jnp.dot(im2col, w_slab, preferred_element_type=f32)
        return jnp.maximum(y, 0.0)                       # ReLU

    def max_pool(y, sel, out_rows):
        """MaxPool1d(P) via ONE stacked 0/1-selector matmul + VPU max."""
        z = jnp.dot(sel, y, preferred_element_type=f32)  # (P*out_rows, c)
        r = z[0:out_rows, :]
        for p in range(1, P):                            # split is 8-aligned
            r = jnp.maximum(r, z[p * out_rows:(p + 1) * out_rows, :])
        return r

    x = x_ref[...]                                       # (B*L, C0) batch-major
    a1 = conv_relu(x, C0, SEQ_LEN, c1w)                  # (32, 8)
    a1 = max_pool(a1, sel1, B * _LP1)                    # (16, 8)  batch-major
    a2 = conv_relu(a1, C1, _LP1, c2w)                    # (16, 16)
    a2 = max_pool(a2, sel2, B * _T)                      # (8, 16)  TIME-major

    # ---- forward LSTM, batch-stacked; input projection hoisted --------------
    xproj = jnp.dot(a2, wih_f, preferred_element_type=f32) + bias_f  # (T*B,128)
    h = jnp.zeros((B, H), f32)
    c = jnp.zeros((B, H), f32)
    for t in range(_T):                                  # static trip count (4)
        g = xproj[t * B:(t + 1) * B, :] + jnp.dot(
            h, whh_f, preferred_element_type=f32)        # (B, 128)
        s = jnp.tanh(0.5 * g)                            # ONE tanh for 4 gates
        i_g = 0.5 * s[:, 0:H] + 0.5                      # sigmoid(i)
        f_g = 0.5 * s[:, H:2 * H] + 0.5                  # sigmoid(f)
        g_g = s[:, 2 * H:3 * H]                          # tanh(g) (cols x2 host-side)
        o_g = 0.5 * s[:, 3 * H:4 * H] + 0.5              # sigmoid(o)
        c = f_g * c + i_g * g_g
        h = o_g * jnp.tanh(c)
    h_f = h

    # ---- backward direction at the LAST output timestep: one zero-state step.
    # Zero h,c => Whh_b and the forget gate legitimately drop out.
    gb = jnp.dot(a2[(_T - 1) * B:_T * B, :], wih_b,
                 preferred_element_type=f32) + bias_b    # (B, 128)
    sb = jnp.tanh(0.5 * gb)
    i_b = 0.5 * sb[:, 0:H] + 0.5
    g_b = sb[:, 2 * H:3 * H]
    o_b = 0.5 * sb[:, 3 * H:4 * H] + 0.5
    h_b = o_b * jnp.tanh(i_b * g_b)

    # ---- dense head: one (B,64)@(64,16) matmul, then a 16-lane reduce -------
    hcat = jnp.concatenate([h_f, h_b], axis=1)           # (B, 64)
    z1 = 0.5 * jnp.tanh(0.5 * (jnp.dot(hcat, w1, preferred_element_type=f32)
                               + b1)) + 0.5              # sigmoid
    logit = jnp.sum(z1 * w2t, axis=1, keepdims=True) + b2
    o_ref[...] = 0.5 * jnp.tanh(0.5 * logit) + 0.5       # single (B,1) store


@jax.jit
def cnn_bilstm_forward(x_bcl, w_slab):
    """x_bcl: (B, C, L) as in PyTorch Conv1d.  Returns (B, 1) sigmoid outputs."""
    b, c, l = x_bcl.shape
    x_stack = jnp.transpose(x_bcl, (0, 2, 1)).reshape(b * l, c).astype(jnp.float32)
    return pl.pallas_call(
        fused_forward_kernel,
        out_shape=jax.ShapeDtypeStruct((b, 1), jnp.float32),
        grid=(1,),                       # single invocation, whole net in VMEM
        in_specs=[pl.BlockSpec((b * l, c), lambda i: (0, 0)),
                  pl.BlockSpec((SLAB_ROWS, SLAB_LANES), lambda i: (0, 0))],
        out_specs=pl.BlockSpec((b, 1), lambda i: (0, 0)),
        compiler_params=pltpu.CompilerParams(
            dimension_semantics=("arbitrary",)),   # micro-kernel: single core
    )(x_stack, w_slab)


# ----------------------------------------------------------------------------
# Parameters (deterministic, synthetic), host-side packing, pure-JAX reference
# ----------------------------------------------------------------------------
def init_params(key):
    ks = iter(jax.random.split(key, 16))
    conv = []
    c_in = INPUT_CHANNELS
    for c_out in CONV_FILTERS:
        w = 0.3 * jax.random.normal(
            next(ks), (CONV_KERNEL_SIZE, c_in, c_out), jnp.float32)
        b = 0.1 * jax.random.normal(next(ks), (c_out,), jnp.float32)
        conv.append((w, b))
        c_in = c_out
    feat, hidden = c_in, LSTM_UNITS

    def lstm_dir(k):
        k1, k2, k3 = jax.random.split(k, 3)
        # gate-packed columns [i | f | g | o]; bias = b_ih + b_hh combined.
        wih = 0.2 * jax.random.normal(k1, (feat, 4 * hidden), jnp.float32)
        whh = 0.2 * jax.random.normal(k2, (hidden, 4 * hidden), jnp.float32)
        bias = 0.1 * jax.random.normal(k3, (1, 4 * hidden), jnp.float32)
        return wih, whh, bias

    wih_f, whh_f, b_f = lstm_dir(next(ks))
    # Whh_b is mathematically unused (only the zero-state single backward step
    # is consumed by this forward), so it is not kept.
    wih_b, _unused_whh_b, b_b = lstm_dir(next(ks))
    return dict(
        conv=conv,
        wih_f=wih_f, whh_f=whh_f, b_f=b_f,
        wih_b=wih_b, b_b=b_b,
        w1=0.2 * jax.random.normal(next(ks), (2 * hidden, DENSE_UNITS),
                                   jnp.float32),
        b1=0.1 * jax.random.normal(next(ks), (1, DENSE_UNITS), jnp.float32),
        w2=0.2 * jax.random.normal(next(ks), (DENSE_UNITS, 1), jnp.float32),
        b2=0.1 * jax.random.normal(next(ks), (1, 1), jnp.float32),
    )


def _pool_selector(l_conv, pool, batch, time_major_out):
    """Stacked 0/1 selector: (pool*batch*l_pool, batch*l_conv).

    Block p (rows [p*R:(p+1)*R], R=batch*l_pool) selects conv column
    b*l_conv + t*pool + p into output row (t*batch+b) if time_major_out else
    (b*l_pool+t).  max over the pool blocks == MaxPool1d(pool) per batch.
    """
    l_pool = l_conv // pool
    rows = batch * l_pool
    sel = np.zeros((pool * rows, batch * l_conv), np.float32)
    for p in range(pool):
        for b in range(batch):
            for t in range(l_pool):
                orow = (t * batch + b) if time_major_out else (b * l_pool + t)
                sel[p * rows + orow, b * l_conv + t * pool + p] = 1.0
    return sel


def pack_params(p):
    """Pack ALL weights + pooling selectors into one 8-row-aligned (248,128) slab."""
    H = LSTM_UNITS
    K = CONV_KERNEL_SIZE
    (w1c, b1c), (w2c, b2c) = p["conv"]

    def scale_g(w):
        # tanh-fusion trick: pre-scale the g-gate columns [2H:3H) by 2 so a
        # single tanh(0.5*g) in-kernel gives all four gates.  Applied
        # consistently to wih_f, whh_f, b_f, wih_b, b_b.
        w = np.asarray(w, np.float32).copy()
        w[..., 2 * H:3 * H] *= 2.0
        return w

    W = np.zeros((SLAB_ROWS, SLAB_LANES), np.float32)

    def put(row, arr):
        arr = np.asarray(arr, np.float32)
        W[row:row + arr.shape[0], 0:arr.shape[1]] = arr

    put(ROW_C1, np.concatenate(
        [np.asarray(w1c).reshape(K * w1c.shape[1], w1c.shape[2]),
         np.asarray(b1c)[None, :]], axis=0))                       # (13, 8)
    put(ROW_C2, np.concatenate(
        [np.asarray(w2c).reshape(K * w2c.shape[1], w2c.shape[2]),
         np.asarray(b2c)[None, :]], axis=0))                       # (25, 16)
    put(ROW_WIH_F, scale_g(p["wih_f"]))                            # (16, 128)
    put(ROW_WIH_B, scale_g(p["wih_b"]))                            # (16, 128)
    put(ROW_WHH_F, scale_g(p["whh_f"]))                            # (32, 128)
    put(ROW_B_F, scale_g(p["b_f"]))                                # (1, 128)
    put(ROW_B_B, scale_g(p["b_b"]))                                # (1, 128)
    put(ROW_W1, p["w1"])                                           # (64, 16)
    put(ROW_HEAD + 0, p["b1"])                                     # (1, 16)
    put(ROW_HEAD + 1, np.asarray(p["w2"]).T)                       # (1, 16)
    put(ROW_HEAD + 2, p["b2"])                                     # (1, 1)
    put(ROW_SEL1, _pool_selector(_L1, POOL_SIZE, BATCH, time_major_out=False))
    put(ROW_SEL2, _pool_selector(_L2, POOL_SIZE, BATCH, time_major_out=True))
    return jnp.asarray(W)


def reference_forward(x_bcl, p):
    """Pure-JAX reference mirroring the PyTorch module (for verification)."""
    hidden = LSTM_UNITS
    x = jnp.transpose(x_bcl, (0, 2, 1)).astype(jnp.float32)        # (B, L, C)
    for w, b in p["conv"]:
        ksz, _, c_out = w.shape
        pad = ksz // 2
        xp = jnp.pad(x, ((0, 0), (pad, pad), (0, 0)))
        l_conv = x.shape[1] + 2 * pad - (ksz - 1)
        acc = jnp.zeros((x.shape[0], l_conv, c_out), jnp.float32) + b[None, None, :]
        for j in range(ksz):
            acc = acc + jnp.einsum("blc,cd->bld", xp[:, j:j + l_conv, :], w[j])
        acc = jnp.maximum(acc, 0.0)
        l_pool = l_conv // POOL_SIZE
        x = acc[:, :l_pool * POOL_SIZE, :].reshape(
            x.shape[0], l_pool, POOL_SIZE, c_out).max(axis=2)
    bsz, seq_t, _ = x.shape

    def cell(xt, h, c, wih, whh, bias):
        g = xt @ wih + h @ whh + bias
        i = jax.nn.sigmoid(g[:, :hidden])
        f = jax.nn.sigmoid(g[:, hidden:2 * hidden])
        gg = jnp.tanh(g[:, 2 * hidden:3 * hidden])
        o = jax.nn.sigmoid(g[:, 3 * hidden:])
        c = f * c + i * gg
        return o * jnp.tanh(c), c

    h = jnp.zeros((bsz, hidden), jnp.float32)
    c = jnp.zeros((bsz, hidden), jnp.float32)
    for t in range(seq_t):
        h, c = cell(x[:, t, :], h, c, p["wih_f"], p["whh_f"], p["b_f"])
    h_b, _ = cell(x[:, seq_t - 1, :],
                  jnp.zeros((bsz, hidden), jnp.float32),
                  jnp.zeros((bsz, hidden), jnp.float32),
                  p["wih_b"], jnp.zeros((hidden, 4 * hidden), jnp.float32),
                  p["b_b"])
    z1 = jax.nn.sigmoid(jnp.concatenate([h, h_b], axis=1) @ p["w1"] + p["b1"])
    return jax.nn.sigmoid(z1 @ p["w2"] + p["b2"])


if __name__ == "__main__":
    key = jax.random.PRNGKey(0)
    x = jax.random.normal(key, (BATCH, INPUT_CHANNELS, SEQ_LEN), jnp.float32)
    params = init_params(jax.random.PRNGKey(42))
    w_slab = pack_params(params)

    out = cnn_bilstm_forward(x, w_slab)
    out = jax.block_until_ready(out)

    assert out.shape == (BATCH, 1), out.shape
    assert bool(jnp.all(jnp.isfinite(out)))
    assert bool(jnp.all((out > 0.0) & (out < 1.0)))     # final sigmoid range

    ref = reference_forward(x, params)
    assert bool(jnp.allclose(out, ref, rtol=1e-4, atol=1e-4)), (out, ref)

    print("KERNEL_OK")
</pallas_src>

<mosaic_0001>
module attributes {stable_mosaic.version = 11 : i64} {
  func.func @fused_forward_kernel(%arg0: i32, %arg1: memref<32x4xf32, #tpu.memory_space<vmem>>, %arg2: memref<248x128xf32, #tpu.memory_space<vmem>>, %arg3: memref<2x1xf32, #tpu.memory_space<vmem>>) attributes {dimension_semantics = [#tpu.dimension_semantics<arbitrary>], iteration_bounds = array<i64: 1>, scalar_prefetch = 0 : i64, scratch_operands = 0 : i64, tpu.core_type = #tpu.core_type<tc>, window_params = [{pipeline_mode = #tpu.pipeline_mode<synchronous>, transform_indices = @transform_0, window_bounds = array<i64: 32, 4>}, {pipeline_mode = #tpu.pipeline_mode<synchronous>, transform_indices = @transform_1, window_bounds = array<i64: 248, 128>}, {pipeline_mode = #tpu.pipeline_mode<synchronous>, transform_indices = @transform_2, window_bounds = array<i64: 2, 1>}]} {
    %c0 = arith.constant 0 : index
    %c0_0 = arith.constant 0 : index
    %0 = vector.load %arg2[%c0, %c0_0] : memref<248x128xf32, #tpu.memory_space<vmem>>, vector<13x8xf32>
    %c16 = arith.constant 16 : index
    %c0_1 = arith.constant 0 : index
    %1 = vector.load %arg2[%c16, %c0_1] : memref<248x128xf32, #tpu.memory_space<vmem>>, vector<25x16xf32>
    %c48 = arith.constant 48 : index
    %c0_2 = arith.constant 0 : index
    %2 = vector.load %arg2[%c48, %c0_2] : memref<248x128xf32, #tpu.memory_space<vmem>>, vector<16x128xf32>
    %c64 = arith.constant 64 : index
    %c0_3 = arith.constant 0 : index
    %3 = vector.load %arg2[%c64, %c0_3] : memref<248x128xf32, #tpu.memory_space<vmem>>, vector<16x128xf32>
    %c80 = arith.constant 80 : index
    %c0_4 = arith.constant 0 : index
    %4 = vector.load %arg2[%c80, %c0_4] : memref<248x128xf32, #tpu.memory_space<vmem>>, vector<32x128xf32>
    %c112 = arith.constant 112 : index
    %c0_5 = arith.constant 0 : index
    %5 = vector.load %arg2[%c112, %c0_5] : memref<248x128xf32, #tpu.memory_space<vmem>>, vector<1x128xf32>
    %c120 = arith.constant 120 : index
    %c0_6 = arith.constant 0 : index
    %6 = vector.load %arg2[%c120, %c0_6] : memref<248x128xf32, #tpu.memory_space<vmem>>, vector<1x128xf32>
    %c128 = arith.constant 128 : index
    %c0_7 = arith.constant 0 : index
    %7 = vector.load %arg2[%c128, %c0_7] : memref<248x128xf32, #tpu.memory_space<vmem>>, vector<64x16xf32>
    %c192 = arith.constant 192 : index
    %c0_8 = arith.constant 0 : index
    %8 = vector.load %arg2[%c192, %c0_8] : memref<248x128xf32, #tpu.memory_space<vmem>>, vector<8x128xf32>
    %9 = vector.extract_strided_slice %8 {offsets = [0, 0], sizes = [1, 16], strides = [1, 1]} : vector<8x128xf32> to vector<1x16xf32>
    %10 = vector.extract_strided_slice %8 {offsets = [1, 0], sizes = [1, 16], strides = [1, 1]} : vector<8x128xf32> to vector<1x16xf32>
    %11 = vector.extract_strided_slice %8 {offsets = [2, 0], sizes = [1, 1], strides = [1, 1]} : vector<8x128xf32> to vector<1x1xf32>
    %c200 = arith.constant 200 : index
    %c0_9 = arith.constant 0 : index
    %12 = vector.load %arg2[%c200, %c0_9] : memref<248x128xf32, #tpu.memory_space<vmem>>, vector<32x32xf32>
    %c232 = arith.constant 232 : index
    %c0_10 = arith.constant 0 : index
    %13 = vector.load %arg2[%c232, %c0_10] : memref<248x128xf32, #tpu.memory_space<vmem>>, vector<16x16xf32>
    %c0_11 = arith.constant 0 : index
    %c0_12 = arith.constant 0 : index
    %14 = vector.load %arg1[%c0_11, %c0_12] : memref<32x4xf32, #tpu.memory_space<vmem>>, vector<32x4xf32>
    %cst = arith.constant 0.000000e+00 : f32
    %15 = vector.broadcast %cst : f32 to vector<1x4xf32>
    %cst_13 = arith.constant 1.000000e+00 : f32
    %16 = vector.broadcast %cst_13 : f32 to vector<16x1xf32>
    %17 = vector.extract_strided_slice %14 {offsets = [0, 0], sizes = [16, 4], strides = [1, 1]} : vector<32x4xf32> to vector<16x4xf32>
    %18 = tpu.concatenate %15, %17, %15 in 0 : vector<1x4xf32>, vector<16x4xf32>, vector<1x4xf32> -> vector<18x4xf32>
    %19 = vector.extract_strided_slice %18 {offsets = [0, 0], sizes = [16, 4], strides = [1, 1]} : vector<18x4xf32> to vector<16x4xf32>
    %20 = vector.extract_strided_slice %18 {offsets = [1, 0], sizes = [16, 4], strides = [1, 1]} : vector<18x4xf32> to vector<16x4xf32>
    %21 = vector.extract_strided_slice %18 {offsets = [2, 0], sizes = [16, 4], strides = [1, 1]} : vector<18x4xf32> to vector<16x4xf32>
    %22 = tpu.concatenate %19, %20, %21, %16 in 1 : vector<16x4xf32>, vector<16x4xf32>, vector<16x4xf32>, vector<16x1xf32> -> vector<16x13xf32>
    %23 = vector.extract_strided_slice %14 {offsets = [16, 0], sizes = [16, 4], strides = [1, 1]} : vector<32x4xf32> to vector<16x4xf32>
    %24 = tpu.concatenate %15, %23, %15 in 0 : vector<1x4xf32>, vector<16x4xf32>, vector<1x4xf32> -> vector<18x4xf32>
    %25 = vector.extract_strided_slice %24 {offsets = [0, 0], sizes = [16, 4], strides = [1, 1]} : vector<18x4xf32> to vector<16x4xf32>
    %26 = vector.extract_strided_slice %24 {offsets = [1, 0], sizes = [16, 4], strides = [1, 1]} : vector<18x4xf32> to vector<16x4xf32>
    %27 = vector.extract_strided_slice %24 {offsets = [2, 0], sizes = [16, 4], strides = [1, 1]} : vector<18x4xf32> to vector<16x4xf32>
    %28 = tpu.concatenate %25, %26, %27, %16 in 1 : vector<16x4xf32>, vector<16x4xf32>, vector<16x4xf32>, vector<16x1xf32> -> vector<16x13xf32>
    %29 = tpu.concatenate %22, %28 in 0 : vector<16x13xf32>, vector<16x13xf32> -> vector<32x13xf32>
    %cst_14 = arith.constant dense<0.000000e+00> : vector<32x8xf32>
    %30 = tpu.matmul %29, %0, %cst_14 {dimension_numbers = #tpu.dot_dimension_numbers<[1], [0], [0], [1], [0, 0, 1, 1], [], []>} : vector<32x13xf32>, vector<13x8xf32>, vector<32x8xf32> -> vector<32x8xf32>
    %cst_15 = arith.constant 0.000000e+00 : f32
    %31 = vector.broadcast %cst_15 : f32 to vector<32x8xf32>
    %32 = arith.maximumf %30, %31 : vector<32x8xf32>
    %cst_16 = arith.constant dense<0.000000e+00> : vector<32x8xf32>
    %33 = tpu.matmul %12, %32, %cst_16 {dimension_numbers = #tpu.dot_dimension_numbers<[1], [0], [0], [1], [0, 0, 1, 1], [], []>} : vector<32x32xf32>, vector<32x8xf32>, vector<32x8xf32> -> vector<32x8xf32>
    %34 = vector.extract_strided_slice %33 {offsets = [0, 0], sizes = [16, 8], strides = [1, 1]} : vector<32x8xf32> to vector<16x8xf32>
    %35 = vector.extract_strided_slice %33 {offsets = [16, 0], sizes = [16, 8], strides = [1, 1]} : vector<32x8xf32> to vector<16x8xf32>
    %36 = arith.maximumf %34, %35 : vector<16x8xf32>
    %cst_17 = arith.constant 0.000000e+00 : f32
    %37 = vector.broadcast %cst_17 : f32 to vector<1x8xf32>
    %cst_18 = arith.constant 1.000000e+00 : f32
    %38 = vector.broadcast %cst_18 : f32 to vector<8x1xf32>
    %39 = vector.extract_strided_slice %36 {offsets = [0, 0], sizes = [8, 8], strides = [1, 1]} : vector<16x8xf32> to vector<8x8xf32>
    %40 = tpu.concatenate %37, %39, %37 in 0 : vector<1x8xf32>, vector<8x8xf32>, vector<1x8xf32> -> vector<10x8xf32>
    %41 = vector.extract_strided_slice %40 {offsets = [0, 0], sizes = [8, 8], strides = [1, 1]} : vector<10x8xf32> to vector<8x8xf32>
    %42 = vector.extract_strided_slice %40 {offsets = [1, 0], sizes = [8, 8], strides = [1, 1]} : vector<10x8xf32> to vector<8x8xf32>
    %43 = vector.extract_strided_slice %40 {offsets = [2, 0], sizes = [8, 8], strides = [1, 1]} : vector<10x8xf32> to vector<8x8xf32>
    %44 = tpu.concatenate %41, %42, %43, %38 in 1 : vector<8x8xf32>, vector<8x8xf32>, vector<8x8xf32>, vector<8x1xf32> -> vector<8x25xf32>
    %45 = vector.extract_strided_slice %36 {offsets = [8, 0], sizes = [8, 8], strides = [1, 1]} : vector<16x8xf32> to vector<8x8xf32>
    %46 = tpu.concatenate %37, %45, %37 in 0 : vector<1x8xf32>, vector<8x8xf32>, vector<1x8xf32> -> vector<10x8xf32>
    %47 = vector.extract_strided_slice %46 {offsets = [0, 0], sizes = [8, 8], strides = [1, 1]} : vector<10x8xf32> to vector<8x8xf32>
    %48 = vector.extract_strided_slice %46 {offsets = [1, 0], sizes = [8, 8], strides = [1, 1]} : vector<10x8xf32> to vector<8x8xf32>
    %49 = vector.extract_strided_slice %46 {offsets = [2, 0], sizes = [8, 8], strides = [1, 1]} : vector<10x8xf32> to vector<8x8xf32>
    %50 = tpu.concatenate %47, %48, %49, %38 in 1 : vector<8x8xf32>, vector<8x8xf32>, vector<8x8xf32>, vector<8x1xf32> -> vector<8x25xf32>
    %51 = tpu.concatenate %44, %50 in 0 : vector<8x25xf32>, vector<8x25xf32> -> vector<16x25xf32>
    %cst_19 = arith.constant dense<0.000000e+00> : vector<16x16xf32>
    %52 = tpu.matmul %51, %1, %cst_19 {dimension_numbers = #tpu.dot_dimension_numbers<[1], [0], [0], [1], [0, 0, 1, 1], [], []>} : vector<16x25xf32>, vector<25x16xf32>, vector<16x16xf32> -> vector<16x16xf32>
    %cst_20 = arith.constant 0.000000e+00 : f32
    %53 = vector.broadcast %cst_20 : f32 to vector<16x16xf32>
    %54 = arith.maximumf %52, %53 : vector<16x16xf32>
    %cst_21 = arith.constant dense<0.000000e+00> : vector<16x16xf32>
    %55 = tpu.matmul %13, %54, %cst_21 {dimension_numbers = #tpu.dot_dimension_numbers<[1], [0], [0], [1], [0, 0, 1, 1], [], []>} : vector<16x16xf32>, vector<16x16xf32>, vector<16x16xf32> -> vector<16x16xf32>
    %56 = vector.extract_strided_slice %55 {offsets = [0, 0], sizes = [8, 16], strides = [1, 1]} : vector<16x16xf32> to vector<8x16xf32>
    %57 = vector.extract_strided_slice %55 {offsets = [8, 0], sizes = [8, 16], strides = [1, 1]} : vector<16x16xf32> to vector<8x16xf32>
    %58 = arith.maximumf %56, %57 : vector<8x16xf32>
    %cst_22 = arith.constant dense<0.000000e+00> : vector<8x128xf32>
    %59 = tpu.matmul %58, %2, %cst_22 {dimension_numbers = #tpu.dot_dimension_numbers<[1], [0], [0], [1], [0, 0, 1, 1], [], []>} : vector<8x16xf32>, vector<16x128xf32>, vector<8x128xf32> -> vector<8x128xf32>
    %60 = vector.broadcast %5 : vector<1x128xf32> to vector<8x128xf32>
    %61 = arith.addf %59, %60 : vector<8x128xf32>
    %cst_23 = arith.constant 0.000000e+00 : f32
    %62 = vector.broadcast %cst_23 : f32 to vector<2x32xf32>
    %cst_24 = arith.constant 0.000000e+00 : f32
    %63 = vector.broadcast %cst_24 : f32 to vector<2x32xf32>
    %64 = vector.extract_strided_slice %61 {offsets = [0, 0], sizes = [2, 128], strides = [1, 1]} : vector<8x128xf32> to vector<2x128xf32>
    %cst_25 = arith.constant dense<0.000000e+00> : vector<2x128xf32>
    %65 = tpu.matmul %62, %4, %cst_25 {dimension_numbers = #tpu.dot_dimension_numbers<[1], [0], [0], [1], [0, 0, 1, 1], [], []>} : vector<2x32xf32>, vector<32x128xf32>, vector<2x128xf32> -> vector<2x128xf32>
    %66 = arith.addf %64, %65 : vector<2x128xf32>
    %cst_26 = arith.constant 5.000000e-01 : f32
    %67 = vector.broadcast %cst_26 : f32 to vector<2x128xf32>
    %68 = arith.mulf %67, %66 : vector<2x128xf32>
    %69 = math.tanh %68 : vector<2x128xf32>
    %70 = vector.extract_strided_slice %69 {offsets = [0, 0], sizes = [2, 32], strides = [1, 1]} : vector<2x128xf32> to vector<2x32xf32>
    %cst_27 = arith.constant 5.000000e-01 : f32
    %71 = vector.broadcast %cst_27 : f32 to vector<2x32xf32>
    %72 = arith.mulf %71, %70 : vector<2x32xf32>
    %cst_28 = arith.constant 5.000000e-01 : f32
    %73 = vector.broadcast %cst_28 : f32 to vector<2x32xf32>
    %74 = arith.addf %72, %73 : vector<2x32xf32>
    %75 = vector.extract_strided_slice %69 {offsets = [0, 32], sizes = [2, 32], strides = [1, 1]} : vector<2x128xf32> to vector<2x32xf32>
    %cst_29 = arith.constant 5.000000e-01 : f32
    %76 = vector.broadcast %cst_29 : f32 to vector<2x32xf32>
    %77 = arith.mulf %76, %75 : vector<2x32xf32>
    %cst_30 = arith.constant 5.000000e-01 : f32
    %78 = vector.broadcast %cst_30 : f32 to vector<2x32xf32>
    %79 = arith.addf %77, %78 : vector<2x32xf32>
    %80 = vector.extract_strided_slice %69 {offsets = [0, 64], sizes = [2, 32], strides = [1, 1]} : vector<2x128xf32> to vector<2x32xf32>
    %81 = vector.extract_strided_slice %69 {offsets = [0, 96], sizes = [2, 32], strides = [1, 1]} : vector<2x128xf32> to vector<2x32xf32>
    %cst_31 = arith.constant 5.000000e-01 : f32
    %82 = vector.broadcast %cst_31 : f32 to vector<2x32xf32>
    %83 = arith.mulf %82, %81 : vector<2x32xf32>
    %cst_32 = arith.constant 5.000000e-01 : f32
    %84 = vector.broadcast %cst_32 : f32 to vector<2x32xf32>
    %85 = arith.addf %83, %84 : vector<2x32xf32>
    %86 = arith.mulf %79, %63 : vector<2x32xf32>
    %87 = arith.mulf %74, %80 : vector<2x32xf32>
    %88 = arith.addf %86, %87 : vector<2x32xf32>
    %89 = math.tanh %88 : vector<2x32xf32>
    %90 = arith.mulf %85, %89 : vector<2x32xf32>
    %91 = vector.extract_strided_slice %61 {offsets = [2, 0], sizes = [2, 128], strides = [1, 1]} : vector<8x128xf32> to vector<2x128xf32>
    %cst_33 = arith.constant dense<0.000000e+00> : vector<2x128xf32>
    %92 = tpu.matmul %90, %4, %cst_33 {dimension_numbers = #tpu.dot_dimension_numbers<[1], [0], [0], [1], [0, 0, 1, 1], [], []>} : vector<2x32xf32>, vector<32x128xf32>, vector<2x128xf32> -> vector<2x128xf32>
    %93 = arith.addf %91, %92 : vector<2x128xf32>
    %cst_34 = arith.constant 5.000000e-01 : f32
    %94 = vector.broadcast %cst_34 : f32 to vector<2x128xf32>
    %95 = arith.mulf %94, %93 : vector<2x128xf32>
    %96 = math.tanh %95 : vector<2x128xf32>
    %97 = vector.extract_strided_slice %96 {offsets = [0, 0], sizes = [2, 32], strides = [1, 1]} : vector<2x128xf32> to vector<2x32xf32>
    %cst_35 = arith.constant 5.000000e-01 : f32
    %98 = vector.broadcast %cst_35 : f32 to vector<2x32xf32>
    %99 = arith.mulf %98, %97 : vector<2x32xf32>
    %cst_36 = arith.constant 5.000000e-01 : f32
    %100 = vector.broadcast %cst_36 : f32 to vector<2x32xf32>
    %101 = arith.addf %99, %100 : vector<2x32xf32>
    %102 = vector.extract_strided_slice %96 {offsets = [0, 32], sizes = [2, 32], strides = [1, 1]} : vector<2x128xf32> to vector<2x32xf32>
    %cst_37 = arith.constant 5.000000e-01 : f32
    %103 = vector.broadcast %cst_37 : f32 to vector<2x32xf32>
    %104 = arith.mulf %103, %102 : vector<2x32xf32>
    %cst_38 = arith.constant 5.000000e-01 : f32
    %105 = vector.broadcast %cst_38 : f32 to vector<2x32xf32>
    %106 = arith.addf %104, %105 : vector<2x32xf32>
    %107 = vector.extract_strided_slice %96 {offsets = [0, 64], sizes = [2, 32], strides = [1, 1]} : vector<2x128xf32> to vector<2x32xf32>
    %108 = vector.extract_strided_slice %96 {offsets = [0, 96], sizes = [2, 32], strides = [1, 1]} : vector<2x128xf32> to vector<2x32xf32>
    %cst_39 = arith.constant 5.000000e-01 : f32
    %109 = vector.broadcast %cst_39 : f32 to vector<2x32xf32>
    %110 = arith.mulf %109, %108 : vector<2x32xf32>
    %cst_40 = arith.constant 5.000000e-01 : f32
    %111 = vector.broadcast %cst_40 : f32 to vector<2x32xf32>
    %112 = arith.addf %110, %111 : vector<2x32xf32>
    %113 = arith.mulf %106, %88 : vector<2x32xf32>
    %114 = arith.mulf %101, %107 : vector<2x32xf32>
    %115 = arith.addf %113, %114 : vector<2x32xf32>
    %116 = math.tanh %115 : vector<2x32xf32>
    %117 = arith.mulf %112, %116 : vector<2x32xf32>
    %118 = vector.extract_strided_slice %61 {offsets = [4, 0], sizes = [2, 128], strides = [1, 1]} : vector<8x128xf32> to vector<2x128xf32>
    %cst_41 = arith.constant dense<0.000000e+00> : vector<2x128xf32>
    %119 = tpu.matmul %117, %4, %cst_41 {dimension_numbers = #tpu.dot_dimension_numbers<[1], [0], [0], [1], [0, 0, 1, 1], [], []>} : vector<2x32xf32>, vector<32x128xf32>, vector<2x128xf32> -> vector<2x128xf32>
    %120 = arith.addf %118, %119 : vector<2x128xf32>
    %cst_42 = arith.constant 5.000000e-01 : f32
    %121 = vector.broadcast %cst_42 : f32 to vector<2x128xf32>
    %122 = arith.mulf %121, %120 : vector<2x128xf32>
    %123 = math.tanh %122 : vector<2x128xf32>
    %124 = vector.extract_strided_slice %123 {offsets = [0, 0], sizes = [2, 32], strides = [1, 1]} : vector<2x128xf32> to vector<2x32xf32>
    %cst_43 = arith.constant 5.000000e-01 : f32
    %125 = vector.broadcast %cst_43 : f32 to vector<2x32xf32>
    %126 = arith.mulf %125, %124 : vector<2x32xf32>
    %cst_44 = arith.constant 5.000000e-01 : f32
    %127 = vector.broadcast %cst_44 : f32 to vector<2x32xf32>
    %128 = arith.addf %126, %127 : vector<2x32xf32>
    %129 = vector.extract_strided_slice %123 {offsets = [0, 32], sizes = [2, 32], strides = [1, 1]} : vector<2x128xf32> to vector<2x32xf32>
    %cst_45 = arith.constant 5.000000e-01 : f32
    %130 = vector.broadcast %cst_45 : f32 to vector<2x32xf32>
    %131 = arith.mulf %130, %129 : vector<2x32xf32>
    %cst_46 = arith.constant 5.000000e-01 : f32
    %132 = vector.broadcast %cst_46 : f32 to vector<2x32xf32>
    %133 = arith.addf %131, %132 : vector<2x32xf32>
    %134 = vector.extract_strided_slice %123 {offsets = [0, 64], sizes = [2, 32], strides = [1, 1]} : vector<2x128xf32> to vector<2x32xf32>
    %135 = vector.extract_strided_slice %123 {offsets = [0, 96], sizes = [2, 32], strides = [1, 1]} : vector<2x128xf32> to vector<2x32xf32>
    %cst_47 = arith.constant 5.000000e-01 : f32
    %136 = vector.broadcast %cst_47 : f32 to vector<2x32xf32>
    %137 = arith.mulf %136, %135 : vector<2x32xf32>
    %cst_48 = arith.constant 5.000000e-01 : f32
    %138 = vector.broadcast %cst_48 : f32 to vector<2x32xf32>
    %139 = arith.addf %137, %138 : vector<2x32xf32>
    %140 = arith.mulf %133, %115 : vector<2x32xf32>
    %141 = arith.mulf %128, %134 : vector<2x32xf32>
    %142 = arith.addf %140, %141 : vector<2x32xf32>
    %143 = math.tanh %142 : vector<2x32xf32>
    %144 = arith.mulf %139, %143 : vector<2x32xf32>
    %145 = vector.extract_strided_slice %61 {offsets = [6, 0], sizes = [2, 128], strides = [1, 1]} : vector<8x128xf32> to vector<2x128xf32>
    %cst_49 = arith.constant dense<0.000000e+00> : vector<2x128xf32>
    %146 = tpu.matmul %144, %4, %cst_49 {dimension_numbers = #tpu.dot_dimension_numbers<[1], [0], [0], [1], [0, 0, 1, 1], [], []>} : vector<2x32xf32>, vector<32x128xf32>, vector<2x128xf32> -> vector<2x128xf32>
    %147 = arith.addf %145, %146 : vector<2x128xf32>
    %cst_50 = arith.constant 5.000000e-01 : f32
    %148 = vector.broadcast %cst_50 : f32 to vector<2x128xf32>
    %149 = arith.mulf %148, %147 : vector<2x128xf32>
    %150 = math.tanh %149 : vector<2x128xf32>
    %151 = vector.extract_strided_slice %150 {offsets = [0, 0], sizes = [2, 32], strides = [1, 1]} : vector<2x128xf32> to vector<2x32xf32>
    %cst_51 = arith.constant 5.000000e-01 : f32
    %152 = vector.broadcast %cst_51 : f32 to vector<2x32xf32>
    %153 = arith.mulf %152, %151 : vector<2x32xf32>
    %cst_52 = arith.constant 5.000000e-01 : f32
    %154 = vector.broadcast %cst_52 : f32 to vector<2x32xf32>
    %155 = arith.addf %153, %154 : vector<2x32xf32>
    %156 = vector.extract_strided_slice %150 {offsets = [0, 32], sizes = [2, 32], strides = [1, 1]} : vector<2x128xf32> to vector<2x32xf32>
    %cst_53 = arith.constant 5.000000e-01 : f32
    %157 = vector.broadcast %cst_53 : f32 to vector<2x32xf32>
    %158 = arith.mulf %157, %156 : vector<2x32xf32>
    %cst_54 = arith.constant 5.000000e-01 : f32
    %159 = vector.broadcast %cst_54 : f32 to vector<2x32xf32>
    %160 = arith.addf %158, %159 : vector<2x32xf32>
    %161 = vector.extract_strided_slice %150 {offsets = [0, 64], sizes = [2, 32], strides = [1, 1]} : vector<2x128xf32> to vector<2x32xf32>
    %162 = vector.extract_strided_slice %150 {offsets = [0, 96], sizes = [2, 32], strides = [1, 1]} : vector<2x128xf32> to vector<2x32xf32>
    %cst_55 = arith.constant 5.000000e-01 : f32
    %163 = vector.broadcast %cst_55 : f32 to vector<2x32xf32>
    %164 = arith.mulf %163, %162 : vector<2x32xf32>
    %cst_56 = arith.constant 5.000000e-01 : f32
    %165 = vector.broadcast %cst_56 : f32 to vector<2x32xf32>
    %166 = arith.addf %164, %165 : vector<2x32xf32>
    %167 = arith.mulf %160, %142 : vector<2x32xf32>
    %168 = arith.mulf %155, %161 : vector<2x32xf32>
    %169 = arith.addf %167, %168 : vector<2x32xf32>
    %170 = math.tanh %169 : vector<2x32xf32>
    %171 = arith.mulf %166, %170 : vector<2x32xf32>
    %172 = vector.extract_strided_slice %58 {offsets = [6, 0], sizes = [2, 16], strides = [1, 1]} : vector<8x16xf32> to vector<2x16xf32>
    %cst_57 = arith.constant dense<0.000000e+00> : vector<2x128xf32>
    %173 = tpu.matmul %172, %3, %cst_57 {dimension_numbers = #tpu.dot_dimension_numbers<[1], [0], [0], [1], [0, 0, 1, 1], [], []>} : vector<2x16xf32>, vector<16x128xf32>, vector<2x128xf32> -> vector<2x128xf32>
    %174 = vector.broadcast %6 : vector<1x128xf32> to vector<2x128xf32>
    %175 = arith.addf %173, %174 : vector<2x128xf32>
    %cst_58 = arith.constant 5.000000e-01 : f32
    %176 = vector.broadcast %cst_58 : f32 to vector<2x128xf32>
    %177 = arith.mulf %176, %175 : vector<2x128xf32>
    %178 = math.tanh %177 : vector<2x128xf32>
    %179 = vector.extract_strided_slice %178 {offsets = [0, 0], sizes = [2, 32], strides = [1, 1]} : vector<2x128xf32> to vector<2x32xf32>
    %cst_59 = arith.constant 5.000000e-01 : f32
    %180 = vector.broadcast %cst_59 : f32 to vector<2x32xf32>
    %181 = arith.mulf %180, %179 : vector<2x32xf32>
    %cst_60 = arith.constant 5.000000e-01 : f32
    %182 = vector.broadcast %cst_60 : f32 to vector<2x32xf32>
    %183 = arith.addf %181, %182 : vector<2x32xf32>
    %184 = vector.extract_strided_slice %178 {offsets = [0, 64], sizes = [2, 32], strides = [1, 1]} : vector<2x128xf32> to vector<2x32xf32>
    %185 = vector.extract_strided_slice %178 {offsets = [0, 96], sizes = [2, 32], strides = [1, 1]} : vector<2x128xf32> to vector<2x32xf32>
    %cst_61 = arith.constant 5.000000e-01 : f32
    %186 = vector.broadcast %cst_61 : f32 to vector<2x32xf32>
    %187 = arith.mulf %186, %185 : vector<2x32xf32>
    %cst_62 = arith.constant 5.000000e-01 : f32
    %188 = vector.broadcast %cst_62 : f32 to vector<2x32xf32>
    %189 = arith.addf %187, %188 : vector<2x32xf32>
    %190 = arith.mulf %183, %184 : vector<2x32xf32>
    %191 = math.tanh %190 : vector<2x32xf32>
    %192 = arith.mulf %189, %191 : vector<2x32xf32>
    %193 = tpu.concatenate %171, %192 in 1 : vector<2x32xf32>, vector<2x32xf32> -> vector<2x64xf32>
    %cst_63 = arith.constant dense<0.000000e+00> : vector<2x16xf32>
    %194 = tpu.matmul %193, %7, %cst_63 {dimension_numbers = #tpu.dot_dimension_numbers<[1], [0], [0], [1], [0, 0, 1, 1], [], []>} : vector<2x64xf32>, vector<64x16xf32>, vector<2x16xf32> -> vector<2x16xf32>
    %195 = vector.broadcast %9 : vector<1x16xf32> to vector<2x16xf32>
    %196 = arith.addf %194, %195 : vector<2x16xf32>
    %cst_64 = arith.constant 5.000000e-01 : f32
    %197 = vector.broadcast %cst_64 : f32 to vector<2x16xf32>
    %198 = arith.mulf %197, %196 : vector<2x16xf32>
    %199 = math.tanh %198 : vector<2x16xf32>
    %cst_65 = arith.constant 5.000000e-01 : f32
    %200 = vector.broadcast %cst_65 : f32 to vector<2x16xf32>
    %201 = arith.mulf %200, %199 : vector<2x16xf32>
    %cst_66 = arith.constant 5.000000e-01 : f32
    %202 = vector.broadcast %cst_66 : f32 to vector<2x16xf32>
    %203 = arith.addf %201, %202 : vector<2x16xf32>
    %204 = vector.broadcast %10 : vector<1x16xf32> to vector<2x16xf32>
    %205 = arith.mulf %203, %204 : vector<2x16xf32>
    %cst_67 = arith.constant dense<0.000000e+00> : vector<2xf32>
    %206 = vector.multi_reduction <add>, %205, %cst_67 [1] : vector<2x16xf32> to vector<2xf32>
    %207 = vector.shape_cast %206 : vector<2xf32> to vector<2x1xf32>
    %208 = vector.broadcast %11 : vector<1x1xf32> to vector<2x1xf32>
    %209 = arith.addf %207, %208 : vector<2x1xf32>
    %cst_68 = arith.constant 5.000000e-01 : f32
    %210 = vector.broadcast %cst_68 : f32 to vector<2x1xf32>
    %211 = arith.mulf %210, %209 : vector<2x1xf32>
    %212 = math.tanh %211 : vector<2x1xf32>
    %cst_69 = arith.constant 5.000000e-01 : f32
    %213 = vector.broadcast %cst_69 : f32 to vector<2x1xf32>
    %214 = arith.mulf %213, %212 : vector<2x1xf32>
    %cst_70 = arith.constant 5.000000e-01 : f32
    %215 = vector.broadcast %cst_70 : f32 to vector<2x1xf32>
    %216 = arith.addf %214, %215 : vector<2x1xf32>
    %c0_71 = arith.constant 0 : index
    %c0_72 = arith.constant 0 : index
    %217 = vector.load %arg3[%c0_71, %c0_72] : memref<2x1xf32, #tpu.memory_space<vmem>>, vector<2x1xf32>
    tpu.vector_store %arg3[%c0_71, %c0_72], %216 {strides = array<i32>} : memref<2x1xf32, #tpu.memory_space<vmem>>, vector<2x1xf32>,
    return
  }
  func.func @transform_0(%arg0: i32) -> (i32, i32) {
    %c0_i32 = arith.constant 0 : i32
    %c0_i32_0 = arith.constant 0 : i32
    %c0_i32_1 = arith.constant 0 : i32
    return %c0_i32, %c0_i32_0 : i32, i32
  }
  func.func @transform_1(%arg0: i32) -> (i32, i32) {
    %c0_i32 = arith.constant 0 : i32
    %c0_i32_0 = arith.constant 0 : i32
    %c0_i32_1 = arith.constant 0 : i32
    return %c0_i32, %c0_i32_0 : i32, i32
  }
  func.func @transform_2(%arg0: i32) -> (i32, i32) {
    %c0_i32 = arith.constant 0 : i32
    %c0_i32_0 = arith.constant 0 : i32
    %c0_i32_1 = arith.constant 0 : i32
    return %c0_i32, %c0_i32_0 : i32, i32
  }
}

</mosaic_0001>

<llo_original>
// kernel: cnn_bilstm_forward.1
$region0: #{cnn_bilstm_forward.1}
  #allocation0 [shape = 'u32[]', space=smem, size = 0x4, offset = 0x4, fixed_abs, tag = 'smem constant byte address 0x4 - core index']
  #allocation1 [shape = 'u32[72,128]{1,0:T(1,128)}', space=vmem, size = 0x9000, scoped, tag = 'internal scratch']
  %s0 = inlined_call_operand.vmem [shape: f32[32,4], index: 0, kind: input, shape index: {}]
  %s1 = inlined_call_operand.hbm [shape: f32[248,128], index: 1, kind: input, shape index: {}]
  %s2 = inlined_call_operand.vmem [shape: f32[2,1], index: 2, kind: output, shape index: {}]
  %s3 = sld [smem:[#allocation0]]
  $region22: #{cnn_bilstm_forward.1} parent=0
    _
  %s5 = ssub.s32 1, %s3
  %s6 = scalar_select 0, %s5, %s3
  $region1: #{cnn_bilstm_forward.1} parent=0
    #allocation2 [shape = 'u8[126976]{0}', space=vmem, size = 0x1f000, scoped, tag = 'input window, operand 1, single buffered']
    #allocation3 [shape = 's32[1]{0}', space=sflag, size = 0x4, scoped, tag = 'scoped memory for cnn_bilstm_forward.1']
    %7 = vsyncpa [#allocation3], 0
    // Predicated region
    $region2: #{cnn_bilstm_forward.1} parent=1 // pred_check
      _
    $region3: #{cnn_bilstm_forward.1} parent=1 // pred_check_branch
      %9 = sbr.rel (0) target = $region5
    $region4: #{cnn_bilstm_forward.1} parent=1 // pred_region
      _
    $region5: #{cnn_bilstm_forward.1} parent=1 // pred_fallthru
      _
    // Predicated region
    $region6: #{cnn_bilstm_forward.1} parent=1 // pred_check
      _
    $region7: #{cnn_bilstm_forward.1} parent=1 // pred_check_branch
      %11 = sbr.rel (0) target = $region9
    $region8: #{cnn_bilstm_forward.1} parent=1 // pred_region
      %13 = vsyncadd [#allocation3], 0
      %s14 = sshll.u32 %s1, 4
      %s15 = int_to_ptr.hbm [resolvable:$true] %s14
      %s16 = sshll.u32 [#allocation2], 4
      %s17 = int_to_ptr.vmem [resolvable:$true] %s16
      %22 = dma.hbm_to_vmem [thread:$0]  %s15, 3968, %s17, [#allocation3], 128, 128, 8
    $region9: #{cnn_bilstm_forward.1} parent=1 // pred_fallthru
      _
    // Predicated region
    $region10: #{cnn_bilstm_forward.1} parent=1 // pred_check
      _
    $region11: #{cnn_bilstm_forward.1} parent=1 // pred_check_branch
      %24 = sbr.rel (0) target = $region13
    $region12: #{cnn_bilstm_forward.1} parent=1 // pred_region
      %26 = dma.done [#allocation3], 3968
    $region13: #{cnn_bilstm_forward.1} parent=1 // pred_fallthru
      _
    %v27 = vld [vmem:[#allocation2] sm:$0xff]
    %v28 = vld [vmem:[#allocation2 + $0x8] sm:$0x1f]
    %v29 = vld [vmem:[#allocation2 + $0x10] sm:$0xff]
    %v30 = vld [vmem:[#allocation2 + $0x18] sm:$0xff]
    %v31 = vld [vmem:[#allocation2 + $0x20] sm:$0xff]
    %v32 = vld [vmem:[#allocation2 + $0x28] sm:$0x1]
    %v33 = vld [vmem:[#allocation2 + $0x30] sm:$0xff]
    %v34 = vld [vmem:[#allocation2 + $0x38] sm:$0xff]
    %v35 = vld [vmem:[#allocation2 + $0x40] sm:$0xff]
    %v36 = vld [vmem:[#allocation2 + $0x48] sm:$0xff]
    %v37 = vld [vmem:[#allocation2 + $0x50] sm:$0xff]
    %v38 = vld [vmem:[#allocation2 + $0x58] sm:$0xff]
    %v39 = vld [vmem:[#allocation2 + $0x60] sm:$0xff]
    %v40 = vld [vmem:[#allocation2 + $0x68] sm:$0xff]
    %v41 = vld [vmem:[#allocation2 + $0x70] sm:$0x1]
    %v42 = vld [vmem:[#allocation2 + $0x78] sm:$0x1]
    %v43 = vld [vmem:[#allocation2 + $0x80] sm:$0xff]
    %v44 = vld [vmem:[#allocation2 + $0x88] sm:$0xff]
    %v45 = vld [vmem:[#allocation2 + $0x90] sm:$0xff]
    %v46 = vld [vmem:[#allocation2 + $0x98] sm:$0xff]
    %v47 = vld [vmem:[#allocation2 + $0xa0] sm:$0xff]
    %v48 = vld [vmem:[#allocation2 + $0xa8] sm:$0xff]
    %v49 = vld [vmem:[#allocation2 + $0xb0] sm:$0xff]
    %v50 = vld [vmem:[#allocation2 + $0xb8] sm:$0xff]
    %v51 = vld [vmem:[#allocation2 + $0xc0] sm:$0xff]
    %v52 = vld [vmem:[#allocation2 + $0xc8] sm:$0xff]
    %v53 = vld [vmem:[#allocation2 + $0xd0] sm:$0xff]
    %v54 = vld [vmem:[#allocation2 + $0xd8] sm:$0xff]
    %v55 = vld [vmem:[#allocation2 + $0xe0] sm:$0xff]
    %v56 = vld [vmem:[#allocation2 + $0xe8] sm:$0xff]
    %v57 = vld [vmem:[#allocation2 + $0xf0] sm:$0xff]
    %v58 = vld [vmem:[%s0] sm:$0xff]
    %v59 = vld [vmem:[%s0 + $0x8] sm:$0xff]
    %v60 = vld [vmem:[%s0 + $0x10] sm:$0xff]
    %v61 = vld [vmem:[%s0 + $0x18] sm:$0xff]
    %vm64 = vcmask 1040384
    %v65 = vrot.slane %v58, 7
    %v66 = vrot.slane %v59, 7
    %v67 = vsel %vm64, %v65, %v66
    %v71 = vsel %vm64, 0.0, %v65
    %v72 = vsel %vm64, %v66, 0.0
    %vm75 = vcmask 1046528
    %v76 = vrot.slane %v71, 1
    %v77 = vrot.slane %v67, 1
    %v78 = vsel %vm75, %v76, %v77
    %v79 = vrot.slane %v72, 1
    %v80 = vsel %vm75, %v77, %v79
    %81 = vrot.lane.b32.xlu0 %v78, 4
    %v82 = vpop.permute.xlu0 %81
    %83 = vrot.lane.b32.xlu0 %v80, 4
    %v84 = vpop.permute.xlu0 %83
    %vm87 = vcmask 1045504
    %v88 = vrot.slane %v71, 2
    %v89 = vrot.slane %v67, 2
    %v90 = vsel %vm87, %v88, %v89
    %v91 = vrot.slane %v72, 2
    %v92 = vsel %vm87, %v89, %v91
    %93 = vrot.lane.b32.xlu0 %v90, 8
    %v94 = vpop.permute.xlu0 %93
    %95 = vrot.lane.b32.xlu0 %v92, 8
    %v96 = vpop.permute.xlu0 %95
    %vm99 = vcmask 31744
    %v100 = vsel %vm99, %v71, %v82
    %v101 = vsel %vm99, %v67, %v84
    %vm102 = vcmask 64512
    %v103 = vsel %vm102, %v100, %v94
    %v104 = vsel %vm102, %v101, %v96
    %vm105 = vcmask 97280
    %v106 = vsel %vm105, %v103, 1.0
    %v107 = vsel %vm105, %v104, 1.0
    %v110 = vrot.slane %v60, 7
    %v111 = vrot.slane %v61, 7
    %v112 = vsel %vm64, %v110, %v111
    %v116 = vsel %vm64, 0.0, %v110
    %v117 = vsel %vm64, %v111, 0.0
    %v120 = vrot.slane %v116, 1
    %v121 = vrot.slane %v112, 1
    %v122 = vsel %vm75, %v120, %v121
    %v123 = vrot.slane %v117, 1
    %v124 = vsel %vm75, %v121, %v123
    %125 = vrot.lane.b32.xlu0 %v122, 4
    %v126 = vpop.permute.xlu0 %125
    %127 = vrot.lane.b32.xlu0 %v124, 4
    %v128 = vpop.permute.xlu0 %127
    %v131 = vrot.slane %v116, 2
    %v132 = vrot.slane %v112, 2
    %v133 = vsel %vm87, %v131, %v132
    %v134 = vrot.slane %v117, 2
    %v135 = vsel %vm87, %v132, %v134
    %136 = vrot.lane.b32.xlu0 %v133, 8
    %v137 = vpop.permute.xlu0 %136
    %138 = vrot.lane.b32.xlu0 %v135, 8
    %v139 = vpop.permute.xlu0 %138
    %v142 = vsel %vm99, %v116, %v126
    %v143 = vsel %vm99, %v112, %v128
    %v144 = vsel %vm102, %v142, %v137
    %v145 = vsel %vm102, %v143, %v139
    %v146 = vsel %vm105, %v144, 1.0
    %v147 = vsel %vm105, %v145, 1.0
    %vm148 = vcmask 105472
    %v150 = vsel %vm148, %v106, 0
    %v153 = vsel %vm148, %v107, 0
    %v156 = vsel %vm148, %v146, 0
    %v159 = vsel %vm148, %v147, 0
    %vm161 = vcmask 1044480
    %v163 = vsel %vm161, %v28, 0
    %165 = vmatpush.msra.mxu0 0.0
    %166 = vmatpush.msra.mxu0 0.0
    %167 = vmatpush.msra.mxu0 0.0
    %168 = vmatpush.msra.mxu0 0.0
    %169 = vmatpush.msra.mxu0 0.0
    %170 = vmatpush.msra.mxu0 0.0
    %171 = vmatpush.msra.mxu0 0.0
    %172 = vmatpush.msra.mxu0 0.0
    %173 = vmatpush.msra.mxu0 0.0
    %174 = vmatpush.msra.mxu0 0.0
    %175 = vmatpush.msra.mxu0 0.0
    %176 = vmatpush.msra.mxu0 0.0
    %177 = vmatpush.msra.mxu0 0.0
    %178 = vmatpush.msra.mxu0 0.0
    %179 = vmatpush.msra.mxu0 %v163
    %180 = vmatpush.msra.mxu0 %v27
    %181 = vmatmul.f32.gmra.mxu0 %v150
    %v182 = vpop.f32.mrf.mxu0
    %v183 = vadd.f32 0.0, %v182
    %184 = vmatmul.f32.gmra.mxu0 %v153
    %v185 = vpop.f32.mrf.mxu0
    %v186 = vadd.f32 0.0, %v185
    %187 = vmatmul.f32.gmra.mxu0 %v156
    %v188 = vpop.f32.mrf.mxu0
    %v189 = vadd.f32 0.0, %v188
    %190 = vmatmul.f32.gmra.mxu0 %v159
    %v191 = vpop.f32.mrf.mxu0
    %v192 = vadd.f32 0.0, %v191
    %193 = vdwg.mxu0
    %v194 = vmax.f32 %v183, 0.0
    %v195 = vmax.f32 %v186, 0.0
    %v196 = vmax.f32 %v189, 0.0
    %v197 = vmax.f32 %v192, 0.0
    %vm198 = vcmask 261120
    %v200 = vsel %vm198, %v52, 0
    %v203 = vsel %vm198, %v53, 0
    %v206 = vsel %vm198, %v54, 0
    %v209 = vsel %vm198, %v55, 0
    %211 = vmatpush.msra.mxu0 0.0
    %212 = vmatpush.msra.mxu0 0.0
    %213 = vmatpush.msra.mxu0 0.0
    %214 = vmatpush.msra.mxu0 0.0
    %215 = vmatpush.msra.mxu0 0.0
    %216 = vmatpush.msra.mxu0 0.0
    %217 = vmatpush.msra.mxu0 0.0
    %218 = vmatpush.msra.mxu0 0.0
    %219 = vmatpush.msra.mxu0 0.0
    %220 = vmatpush.msra.mxu0 0.0
    %221 = vmatpush.msra.mxu0 0.0
    %222 = vmatpush.msra.mxu0 0.0
    %223 = vmatpush.msra.mxu0 %v197
    %224 = vmatpush.msra.mxu0 %v196
    %225 = vmatpush.msra.mxu0 %v195
    %226 = vmatpush.msra.mxu0 %v194
    %227 = vmatmul.f32.gmra.mxu0 %v200
    %v228 = vpop.f32.mrf.mxu0
    %v229 = vadd.f32 0.0, %v228
    %230 = vmatmul.f32.gmra.mxu0 %v203
    %v231 = vpop.f32.mrf.mxu0
    %v232 = vadd.f32 0.0, %v231
    %233 = vmatmul.f32.gmra.mxu0 %v206
    %v234 = vpop.f32.mrf.mxu0
    %v235 = vadd.f32 0.0, %v234
    %236 = vmatmul.f32.gmra.mxu0 %v209
    %v237 = vpop.f32.mrf.mxu0
    %v238 = vadd.f32 0.0, %v237
    %239 = vdwg.mxu0
    %v240 = vmax.f32 %v229, %v235
    %v241 = vmax.f32 %v232, %v238
    %v243 = vrot.slane %v240, 7
    %v245 = vsel %vm64, 0.0, %v243
    %v246 = vsel %vm64, %v243, 0.0
    %v249 = vrot.slane %v245, 1
    %v250 = vrot.slane %v246, 1
    %v251 = vsel %vm75, %v249, %v250
    %252 = vrot.lane.b32.xlu0 %v251, 8
    %v253 = vpop.permute.xlu0 %252
    %v255 = vrot.slane %v245, 2
    %v256 = vrot.slane %v246, 2
    %v257 = vsel %vm87, %v255, %v256
    %258 = vrot.lane.b32.xlu0 %v257, 16
    %v259 = vpop.permute.xlu0 %258
    %v261 = vsel %vm102, %v245, %v253
    %vm262 = vcmask 130048
    %v263 = vsel %vm262, %v261, %v259
    %vm264 = vcmask 195584
    %v265 = vsel %vm264, %v263, 1.0
    %v267 = vrot.slane %v241, 7
    %v269 = vsel %vm64, 0.0, %v267
    %v270 = vsel %vm64, %v267, 0.0
    %v273 = vrot.slane %v269, 1
    %v274 = vrot.slane %v270, 1
    %v275 = vsel %vm75, %v273, %v274
    %276 = vrot.lane.b32.xlu0 %v275, 8
    %v277 = vpop.permute.xlu0 %276
    %v279 = vrot.slane %v269, 2
    %v280 = vrot.slane %v270, 2
    %v281 = vsel %vm87, %v279, %v280
    %282 = vrot.lane.b32.xlu0 %v281, 16
    %v283 = vpop.permute.xlu0 %282
    %v285 = vsel %vm102, %v269, %v277
    %v286 = vsel %vm262, %v285, %v283
    %v287 = vsel %vm264, %v286, 1.0
    %vm288 = vcmask 203776
    %v290 = vsel %vm288, %v265, 0
    %v293 = vsel %vm288, %v287, 0
    %v296 = vsel %vm64, %v32, 0
    %298 = vmatpush.msra.mxu0 0.0
    %299 = vmatpush.msra.mxu0 0.0
    %300 = vmatpush.msra.mxu0 0.0
    %301 = vmatpush.msra.mxu0 0.0
    %302 = vmatpush.msra.mxu0 0.0
    %303 = vmatpush.msra.mxu0 0.0
    %304 = vmatpush.msra.mxu0 0.0
    %305 = vmatpush.msra.mxu0 0.0
    %306 = vmatpush.msra.mxu0 0.0
    %307 = vmatpush.msra.mxu0 0.0
    %308 = vmatpush.msra.mxu0 0.0
    %309 = vmatpush.msra.mxu0 0.0
    %310 = vmatpush.msra.mxu0 %v296
    %311 = vmatpush.msra.mxu0 %v31
    %312 = vmatpush.msra.mxu0 %v30
    %313 = vmatpush.msra.mxu0 %v29
    %314 = vmatmul.f32.gmra.mxu0 %v290
    %v315 = vpop.f32.mrf.mxu0
    %v316 = vadd.f32 0.0, %v315
    %317 = vmatmul.f32.gmra.mxu0 %v293
    %v318 = vpop.f32.mrf.mxu0
    %v319 = vadd.f32 0.0, %v318
    %320 = vdwg.mxu0
    %v321 = vmax.f32 %v316, 0.0
    %v322 = vmax.f32 %v319, 0.0
    %v324 = vsel %vm262, %v56, 0
    %v327 = vsel %vm262, %v57, 0
    %329 = vmatpush.msra.mxu0 0.0
    %330 = vmatpush.msra.mxu0 0.0
    %331 = vmatpush.msra.mxu0 0.0
    %332 = vmatpush.msra.mxu0 0.0
    %333 = vmatpush.msra.mxu0 0.0
    %334 = vmatpush.msra.mxu0 0.0
    %335 = vmatpush.msra.mxu0 0.0
    %336 = vmatpush.msra.mxu0 0.0
    %337 = vmatpush.msra.mxu0 0.0
    %338 = vmatpush.msra.mxu0 0.0
    %339 = vmatpush.msra.mxu0 0.0
    %340 = vmatpush.msra.mxu0 0.0
    %341 = vmatpush.msra.mxu0 0.0
    %342 = vmatpush.msra.mxu0 0.0
    %343 = vmatpush.msra.mxu0 %v322
    %344 = vmatpush.msra.mxu0 %v321
    %345 = vmatmul.f32.gmra.mxu0 %v324
    %v346 = vpop.f32.mrf.mxu0
    %v347 = vadd.f32 0.0, %v346
    %348 = vmatmul.f32.gmra.mxu0 %v327
    %v349 = vpop.f32.mrf.mxu0
    %v350 = vadd.f32 0.0, %v349
    %351 = vdwg.mxu0
    %v352 = vmax.f32 %v347, %v350
    %v353 = vperm.slane %v41, 0
    %v355 = vsel %vm262, %v352, 0
    %357 = vmatpush.msra.mxu0 0.0
    %358 = vmatpush.msra.mxu0 0.0
    %359 = vmatpush.msra.mxu0 0.0
    %360 = vmatpush.msra.mxu0 0.0
    %361 = vmatpush.msra.mxu0 0.0
    %362 = vmatpush.msra.mxu0 0.0
    %363 = vmatpush.msra.mxu0 0.0
    %364 = vmatpush.msra.mxu0 0.0
    %365 = vmatpush.msra.mxu0 0.0
    %366 = vmatpush.msra.mxu0 0.0
    %367 = vmatpush.msra.mxu0 0.0
    %368 = vmatpush.msra.mxu0 0.0
    %369 = vmatpush.msra.mxu0 0.0
    %370 = vmatpush.msra.mxu0 0.0
    %371 = vmatpush.msra.mxu0 %v34
    %372 = vmatpush.msra.mxu0 %v33
    %373 = vmatmul.f32.gmra.mxu0 %v355
    %v374 = vpop.f32.mrf.mxu0
    %v375 = vadd.f32 %v353, %v374
    %376 = vdwg.mxu0
    %v378 = vsel %vm198, 0.0, 0
    %380 = vmatpush.msra.mxu0 0.0
    %381 = vmatpush.msra.mxu0 0.0
    %382 = vmatpush.msra.mxu0 0.0
    %383 = vmatpush.msra.mxu0 0.0
    %384 = vmatpush.msra.mxu0 0.0
    %385 = vmatpush.msra.mxu0 0.0
    %386 = vmatpush.msra.mxu0 0.0
    %387 = vmatpush.msra.mxu0 0.0
    %388 = vmatpush.msra.mxu0 0.0
    %389 = vmatpush.msra.mxu0 0.0
    %390 = vmatpush.msra.mxu0 0.0
    %391 = vmatpush.msra.mxu0 0.0
    %392 = vmatpush.msra.mxu0 %v40
    %393 = vmatpush.msra.mxu0 %v39
    %394 = vmatpush.msra.mxu0 %v38
    %395 = vmatpush.msra.mxu0 %v37
    %396 = vmatmul.f32.gmra.mxu0 %v378
    %v397 = vpop.f32.mrf.mxu0
    %v398 = vadd.f32 0.0, %v397
    %399 = vdwg.mxu0
    %v400 = vadd.f32 %v375, %v398
    %v401 = vmul.f32 %v400, 0.5
    %v402 = vtanh.pop %v401
    %v403 = vmul.f32 %v402, 0.5
    %v404 = vadd.f32 %v403, 0.5
    %v405 = vmul.f32 %v404, 0.0
    %407 = vrot.lane.b32.xlu0 %v402, 64
    %v408 = vpop.permute.xlu0 %407
    %v410 = vmul.f32 %v404, %v408
    %412 = vrot.lane.b32.xlu0 %v410, 32
    %v413 = vpop.permute.xlu0 %412
    %v415 = vadd.f32 %v405, %v413
    %v416 = vtanh.pop %v415
    %418 = vrot.lane.b32.xlu0 %v416, 64
    %v419 = vpop.permute.xlu0 %418
    %v421 = vmul.f32 %v404, %v419
    %423 = vrot.lane.b32.xlu0 %v421, 32
    %v424 = vpop.permute.xlu0 %423
    %v425 = vsel %vm198, %v424, 0
    %427 = vmatpush.msra.mxu0 0.0
    %428 = vmatpush.msra.mxu0 0.0
    %429 = vmatpush.msra.mxu0 0.0
    %430 = vmatpush.msra.mxu0 0.0
    %431 = vmatpush.msra.mxu0 0.0
    %432 = vmatpush.msra.mxu0 0.0
    %433 = vmatpush.msra.mxu0 0.0
    %434 = vmatpush.msra.mxu0 0.0
    %435 = vmatpush.msra.mxu0 0.0
    %436 = vmatpush.msra.mxu0 0.0
    %437 = vmatpush.msra.mxu0 0.0
    %438 = vmatpush.msra.mxu0 0.0
    %439 = vmatpush.msra.mxu0 %v40
    %440 = vmatpush.msra.mxu0 %v39
    %441 = vmatpush.msra.mxu0 %v38
    %442 = vmatpush.msra.mxu0 %v37
    %443 = vmatmul.f32.gmra.mxu0 %v425
    %v444 = vpop.f32.mrf.mxu0
    %v445 = vadd.f32 0.0, %v444
    %446 = vdwg.mxu0
    %v448 = vrot.slane %v445, 6
    %v450 = vadd.f32 %v375, %v448
    %v451 = vmul.f32 %v450, 0.5
    %v452 = vtanh.pop %v451
    %v453 = vmul.f32 %v452, 0.5
    %v454 = vadd.f32 %v453, 0.5
    %v456 = vrot.slane %v415, 6
    %v458 = vmul.f32 %v454, %v456
    %460 = vrot.lane.b32.xlu0 %v452, 64
    %v461 = vpop.permute.xlu0 %460
    %v463 = vmul.f32 %v454, %v461
    %465 = vrot.lane.b32.xlu0 %v463, 32
    %v466 = vpop.permute.xlu0 %465
    %v468 = vadd.f32 %v458, %v466
    %v469 = vtanh.pop %v468
    %471 = vrot.lane.b32.xlu0 %v469, 64
    %v472 = vpop.permute.xlu0 %471
    %v474 = vmul.f32 %v454, %v472
    %v476 = vrot.slane %v474, 2
    %477 = vrot.lane.b32.xlu0 %v476, 32
    %v478 = vpop.permute.xlu0 %477
    %v479 = vsel %vm198, %v478, 0
    %481 = vmatpush.msra.mxu0 0.0
    %482 = vmatpush.msra.mxu0 0.0
    %483 = vmatpush.msra.mxu0 0.0
    %484 = vmatpush.msra.mxu0 0.0
    %485 = vmatpush.msra.mxu0 0.0
    %486 = vmatpush.msra.mxu0 0.0
    %487 = vmatpush.msra.mxu0 0.0
    %488 = vmatpush.msra.mxu0 0.0
    %489 = vmatpush.msra.mxu0 0.0
    %490 = vmatpush.msra.mxu0 0.0
    %491 = vmatpush.msra.mxu0 0.0
    %492 = vmatpush.msra.mxu0 0.0
    %493 = vmatpush.msra.mxu0 %v40
    %494 = vmatpush.msra.mxu0 %v39
    %495 = vmatpush.msra.mxu0 %v38
    %496 = vmatpush.msra.mxu0 %v37
    %497 = vmatmul.f32.gmra.mxu0 %v479
    %v498 = vpop.f32.mrf.mxu0
    %v499 = vadd.f32 0.0, %v498
    %500 = vdwg.mxu0
    %v502 = vrot.slane %v499, 4
    %v504 = vadd.f32 %v375, %v502
    %v505 = vmul.f32 %v504, 0.5
    %v506 = vtanh.pop %v505
    %v507 = vmul.f32 %v506, 0.5
    %v508 = vadd.f32 %v507, 0.5
    %v510 = vrot.slane %v468, 6
    %v512 = vmul.f32 %v508, %v510
    %514 = vrot.lane.b32.xlu0 %v506, 64
    %v515 = vpop.permute.xlu0 %514
    %v517 = vmul.f32 %v508, %v515
    %519 = vrot.lane.b32.xlu0 %v517, 32
    %v520 = vpop.permute.xlu0 %519
    %v522 = vadd.f32 %v512, %v520
    %v523 = vtanh.pop %v522
    %525 = vrot.lane.b32.xlu0 %v523, 64
    %v526 = vpop.permute.xlu0 %525
    %v528 = vmul.f32 %v508, %v526
    %v530 = vrot.slane %v528, 4
    %531 = vrot.lane.b32.xlu0 %v530, 32
    %v532 = vpop.permute.xlu0 %531
    %v533 = vsel %vm198, %v532, 0
    %535 = vmatpush.msra.mxu0 0.0
    %536 = vmatpush.msra.mxu0 0.0
    %537 = vmatpush.msra.mxu0 0.0
    %538 = vmatpush.msra.mxu0 0.0
    %539 = vmatpush.msra.mxu0 0.0
    %540 = vmatpush.msra.mxu0 0.0
    %541 = vmatpush.msra.mxu0 0.0
    %542 = vmatpush.msra.mxu0 0.0
    %543 = vmatpush.msra.mxu0 0.0
    %544 = vmatpush.msra.mxu0 0.0
    %545 = vmatpush.msra.mxu0 0.0
    %546 = vmatpush.msra.mxu0 0.0
    %547 = vmatpush.msra.mxu0 %v40
    %548 = vmatpush.msra.mxu0 %v39
    %549 = vmatpush.msra.mxu0 %v38
    %550 = vmatpush.msra.mxu0 %v37
    %551 = vmatmul.f32.gmra.mxu0 %v533
    %v552 = vpop.f32.mrf.mxu0
    %v553 = vadd.f32 0.0, %v552
    %554 = vdwg.mxu0
    %v556 = vrot.slane %v553, 2
    %v558 = vadd.f32 %v375, %v556
    %v559 = vmul.f32 %v558, 0.5
    %v560 = vtanh.pop %v559
    %v561 = vmul.f32 %v560, 0.5
    %v562 = vadd.f32 %v561, 0.5
    %v564 = vrot.slane %v522, 6
    %v566 = vmul.f32 %v562, %v564
    %568 = vrot.lane.b32.xlu0 %v560, 64
    %v569 = vpop.permute.xlu0 %568
    %v571 = vmul.f32 %v562, %v569
    %573 = vrot.lane.b32.xlu0 %v571, 32
    %v574 = vpop.permute.xlu0 %573
    %v576 = vadd.f32 %v566, %v574
    %v577 = vtanh.pop %v576
    %579 = vrot.lane.b32.xlu0 %v577, 64
    %v580 = vpop.permute.xlu0 %579
    %v582 = vmul.f32 %v562, %v580
    %v583 = vperm.slane %v42, 0
    %v584 = vrot.slane %v352, 6
    %v585 = vsel %vm262, %v584, 0
    %587 = vmatpush.msra.mxu0 0.0
    %588 = vmatpush.msra.mxu0 0.0
    %589 = vmatpush.msra.mxu0 0.0
    %590 = vmatpush.msra.mxu0 0.0
    %591 = vmatpush.msra.mxu0 0.0
    %592 = vmatpush.msra.mxu0 0.0
    %593 = vmatpush.msra.mxu0 0.0
    %594 = vmatpush.msra.mxu0 0.0
    %595 = vmatpush.msra.mxu0 0.0
    %596 = vmatpush.msra.mxu0 0.0
    %597 = vmatpush.msra.mxu0 0.0
    %598 = vmatpush.msra.mxu0 0.0
    %599 = vmatpush.msra.mxu0 0.0
    %600 = vmatpush.msra.mxu0 0.0
    %601 = vmatpush.msra.mxu0 %v36
    %602 = vmatpush.msra.mxu0 %v35
    %603 = vmatmul.f32.gmra.mxu0 %v585
    %v604 = vpop.f32.mrf.mxu0
    %v605 = vadd.f32 %v583, %v604
    %606 = vdwg.mxu0
    %v607 = vmul.f32 %v605, 0.5
    %v608 = vtanh.pop %v607
    %v609 = vmul.f32 %v608, 0.5
    %v610 = vadd.f32 %v609, 0.5
    %612 = vrot.lane.b32.xlu0 %v608, 64
    %v613 = vpop.permute.xlu0 %612
    %v615 = vmul.f32 %v610, %v613
    %v616 = vtanh.pop %v615
    %618 = vrot.lane.b32.xlu0 %v616, 96
    %v619 = vpop.permute.xlu0 %618
    %v621 = vmul.f32 %v610, %v619
    %623 = vrot.lane.b32.xlu0 %v582, 32
    %v624 = vpop.permute.xlu0 %623
    %v627 = vrot.slane %v621, 2
    %628 = vrot.lane.b32.xlu0 %v627, 64
    %v629 = vpop.permute.xlu0 %628
    %v631 = vsel %vm198, %v624, %v629
    %v632 = vperm.slane %v51, 0
    %v634 = vrot.slane %v631, 6
    %vm635 = vcmask 523264
    %v636 = vsel %vm635, %v634, 0
    %638 = vmatpush.msra.mxu0 0.0
    %639 = vmatpush.msra.mxu0 0.0
    %640 = vmatpush.msra.mxu0 0.0
    %641 = vmatpush.msra.mxu0 0.0
    %642 = vmatpush.msra.mxu0 0.0
    %643 = vmatpush.msra.mxu0 0.0
    %644 = vmatpush.msra.mxu0 0.0
    %645 = vmatpush.msra.mxu0 0.0
    %646 = vmatpush.msra.mxu0 %v50
    %647 = vmatpush.msra.mxu0 %v49
    %648 = vmatpush.msra.mxu0 %v48
    %649 = vmatpush.msra.mxu0 %v47
    %650 = vmatpush.msra.mxu0 %v46
    %651 = vmatpush.msra.mxu0 %v45
    %652 = vmatpush.msra.mxu0 %v44
    %653 = vmatpush.msra.mxu0 %v43
    %654 = vmatmul.f32.gmra.mxu0 %v636
    %v655 = vpop.f32.mrf.mxu0
    %v656 = vadd.f32 %v632, %v655
    %657 = vdwg.mxu0
    %v658 = vmul.f32 %v656, 0.5
    %v659 = vtanh.pop %v658
    %v660 = vmul.f32 %v659, 0.5
    %v661 = vadd.f32 %v660, 0.5
    %v662 = vperm.slane %v51, 1
    %v663 = vmul.f32 %v661, %v662
    %vm664 = vcmask 123904
    %v665 = vsel %vm664, %v663, 0.0
    %666 = vadd.xlane.f32.xlu0 %v665
    %v667 = vpop.xlane.xlu0 %666
    %v668 = vperm.slane %v51, 2
    %v669 = vadd.f32 %v667, %v668
    %v670 = vmul.f32 %v669, 0.5
    %v671 = vtanh.pop %v670
    %v672 = vmul.f32 %v671, 0.5
    %v673 = vadd.f32 %v672, 0.5
    %vm674 = vcmask 1024
    %675 = vst.msk [vmem:[%s2] sm:$0x3] %vm674, %v673
    // Predicated region
    $region14: #{cnn_bilstm_forward.1} parent=1 // pred_check
      _
    $region15: #{cnn_bilstm_forward.1} parent=1 // pred_check_branch
      %677 = sbr.rel (0) target = $region17
    $region16: #{cnn_bilstm_forward.1} parent=1 // pred_region
      _
    $region17: #{cnn_bilstm_forward.1} parent=1 // pred_fallthru
      _
    // Predicated region
    $region18: #{cnn_bilstm_forward.1} parent=1 // pred_check
      _
    $region19: #{cnn_bilstm_forward.1} parent=1 // pred_check_branch
      %679 = sbr.rel (0) target = $region21
    $region20: #{cnn_bilstm_forward.1} parent=1 // pred_region
      _
    $region21: #{cnn_bilstm_forward.1} parent=1 // pred_fallthru
      _
    %680 = vsyncpa [#allocation3], 1

</llo_original>
